<compile_context>
chip_gen: v7x
topology: tpu7x:2x2x1
jax: 0.10.0
libtpu: 0.0.40
codegen_flags: <defaults>
</compile_context>

<pallas_src>
import jax
import jax.numpy as jnp
from jax.experimental import pallas as pl
from jax.experimental.pallas import tpu as pltpu


def _round_up(x, m):
    return ((x + m - 1) // m) * m


def _vmem_tile_bytes(rows, cols, dtype):
    """Bytes a (rows, cols) tile actually occupies in VMEM (lane/sublane padded)."""
    itemsize = jnp.dtype(dtype).itemsize
    sublane = 8 * (4 // itemsize)          # 8 for f32, 16 for bf16, 32 for int8
    return _round_up(max(rows, 1), sublane) * _round_up(max(cols, 1), 128) * itemsize


def _vmem_capacity_bytes():
    try:
        return int(pltpu.get_tpu_info().vmem_capacity_bytes)
    except Exception:
        return 64 << 20                    # conservative: v7x per-TensorCore VMEM


def _mlp_kernel(x_ref, w1_ref, b1_ref, w2_ref, b2_ref, o_ref):
    """One batch tile: x(tb,K)bf16, w1(K,Hp)bf16, b1(1,Hp)f32, w2(Hp,Do)bf16, b2(1,Do)f32."""
    # First linear: single MXU pass, f32 accumulation, bias folded into the
    # result (no zero-fill / separate accumulate pass).
    h = jnp.dot(x_ref[...], w1_ref[...],
                preferred_element_type=jnp.float32) + b1_ref[...]
    # LeakyReLU (PyTorch default negative_slope = 0.01), f32 on the VPU.
    h = jnp.where(h > 0, h, jnp.float32(0.01) * h)
    # Second linear: bf16 operands, f32 accumulation, f32 bias add.
    y = jnp.dot(h.astype(jnp.bfloat16), w2_ref[...],
                preferred_element_type=jnp.float32) + b2_ref[...]
    o_ref[...] = y.astype(o_ref.dtype)


def feedforward_encoder(inputs, w1, b1, w2, b2):
    """Computes leaky_relu(concat(inputs, axis=1) @ w1 + b1) @ w2 + b2.

    inputs: list of (B, inp_dim_i) arrays.
    w1: (sum(inp_dim_i), hidden_dim), b1: (hidden_dim,)
    w2: (hidden_dim, out_dim),        b2: (out_dim,)
    """
    inputs = list(inputs)
    B = int(inputs[0].shape[0])
    in_dims = [int(x.shape[1]) for x in inputs]
    K = sum(in_dims)
    H = int(w1.shape[1])
    D_out = int(w2.shape[1])
    out_dtype = inputs[0].dtype

    # Hidden dim padded to 128 lanes: purely internal (never a per-row HBM
    # stream), keeps both MXU passes and the VPU bias/LeakyReLU lane-dense.
    Hp = _round_up(H, 128)
    # Output dim: pad to 128 only when the waste is small (<= ~25%); otherwise
    # store the exact width to minimize the kernel's HBM write traffic.
    Dp = _round_up(D_out, 128)
    D_store = Dp if (Dp - D_out) * 4 <= D_out else D_out

    # ---- parameter prep (once): bf16 weights, f32 biases, zero padding ------
    w1_p = jnp.pad(w1.astype(jnp.bfloat16), ((0, 0), (0, Hp - H)))
    b1_p = jnp.pad(b1.astype(jnp.float32), (0, Hp - H)).reshape(1, Hp)
    w2_p = jnp.pad(w2.astype(jnp.bfloat16),
                   ((0, Hp - H), (0, D_store - D_out)))
    b2_p = jnp.pad(b2.astype(jnp.float32), (0, D_store - D_out)).reshape(1, D_store)

    # ---- activation prep: concat + bf16 cast (fuses into producers under jit)
    x = jnp.concatenate([t.astype(jnp.bfloat16) for t in inputs], axis=1)

    # ---- chip-aware batch-tile sizing ----------------------------------------
    vmem_cap = _vmem_capacity_bytes()
    budget = int(0.6 * vmem_cap)           # ~76 MiB on v5e/v6e, ~38 MiB on v7x

    def vmem_est(tb):
        xb = 2 * _vmem_tile_bytes(tb, K, jnp.bfloat16)            # x, double-buffered
        ob = 2 * _vmem_tile_bytes(tb, D_store, out_dtype)         # out, double-buffered
        wb = 2 * (_vmem_tile_bytes(K, Hp, jnp.bfloat16)           # resident params
                  + _vmem_tile_bytes(Hp, D_store, jnp.bfloat16)   # (default pipeline
                  + _vmem_tile_bytes(1, Hp, jnp.float32)          #  still allocates 2
                  + _vmem_tile_bytes(1, D_store, jnp.float32))    #  buffers each)
        hb = (_vmem_tile_bytes(tb, Hp, jnp.float32)               # f32 h temporary
              + _vmem_tile_bytes(tb, D_store, jnp.float32))       # f32 y temporary
        return xb + ob + wb + hb + (2 << 20)                      # Mosaic scratch

    tb = min(4096, _round_up(B, 16))
    while tb > 16 and vmem_est(tb) > budget:
        tb //= 2
    tb = max(16, _round_up(tb, 16))
    # Give v7x's two TensorCores at least 2 grid steps when the batch is large
    # enough to keep each tile near the roofline; harmless on single-TC chips.
    if B >= 1024:
        tb = min(tb, _round_up(pl.cdiv(B, 2), 16))

    B_pad = _round_up(B, tb)
    num_tiles = B_pad // tb
    if B_pad != B:
        x = jnp.pad(x, ((0, B_pad - B), (0, 0)))

    # ---- specs ----------------------------------------------------------------
    # NOTE: add pipeline_mode=pl.Buffered(3) on x_spec only if profiling shows
    # exposed x DMA at large tb.
    x_spec = pl.BlockSpec((tb, K), lambda i: (i, 0))
    w1_spec = pl.BlockSpec((K, Hp), lambda i: (0, 0))
    b1_spec = pl.BlockSpec((1, Hp), lambda i: (0, 0))
    w2_spec = pl.BlockSpec((Hp, D_store), lambda i: (0, 0))
    b2_spec = pl.BlockSpec((1, D_store), lambda i: (0, 0))
    out_spec = pl.BlockSpec((tb, D_store), lambda i: (i, 0))

    flops = 2 * B_pad * (K * Hp + Hp * D_store)
    bytes_accessed = (
        B_pad * K * 2                                             # bf16 x read
        + (K * Hp + Hp * D_store) * 2 + (Hp + D_store) * 4        # params (once)
        + B_pad * D_store * jnp.dtype(out_dtype).itemsize         # output write
    )
    vmem_limit = int(min(max(2 * vmem_est(tb), 32 << 20), int(0.9 * vmem_cap)))

    out_full = pl.pallas_call(
        _mlp_kernel,
        out_shape=jax.ShapeDtypeStruct((B_pad, D_store), out_dtype),
        grid_spec=pl.GridSpec(
            grid=(num_tiles,),
            in_specs=[x_spec, w1_spec, b1_spec, w2_spec, b2_spec],
            out_specs=out_spec,
        ),
        compiler_params=pltpu.CompilerParams(
            dimension_semantics=("parallel",),
            vmem_limit_bytes=vmem_limit,
        ),
        cost_estimate=pl.CostEstimate(
            flops=int(flops), transcendentals=0,
            bytes_accessed=int(bytes_accessed)),
    )(x, w1_p, b1_p, w2_p, b2_p)

    out = out_full
    if B_pad != B:
        out = out[:B]
    if D_store != D_out:
        out = out[:, :D_out]
    return out


if __name__ == "__main__":
    # Small shapes consistent with the module.
    num_inputs = 2
    inp_dim = 16
    hidden_dim = 32
    out_dim = 8
    batch = 4

    key = jax.random.PRNGKey(0)
    k_in, k_w1, k_b1, k_w2, k_b2 = jax.random.split(key, 5)

    # The torch module's encode() receives several tensors and concatenates them.
    ks = jax.random.split(k_in, num_inputs)
    inputs = [jax.random.normal(ks[i], (batch, inp_dim), dtype=jnp.float32)
              for i in range(num_inputs)]

    d_in = num_inputs * inp_dim
    # Deterministic parameter init (Kaiming-uniform-ish scale, like nn.Linear).
    lim1 = 1.0 / jnp.sqrt(d_in)
    lim2 = 1.0 / jnp.sqrt(hidden_dim)
    w1 = jax.random.uniform(k_w1, (d_in, hidden_dim), jnp.float32, -lim1, lim1)
    b1 = jax.random.uniform(k_b1, (hidden_dim,), jnp.float32, -lim1, lim1)
    w2 = jax.random.uniform(k_w2, (hidden_dim, out_dim), jnp.float32, -lim2, lim2)
    b2 = jax.random.uniform(k_b2, (out_dim,), jnp.float32, -lim2, lim2)

    out = feedforward_encoder(inputs, w1, b1, w2, b2)
    jax.block_until_ready(out)
    assert out.shape == (batch, out_dim), out.shape

    # Reference in plain JAX, matching the kernel's bf16-MXU semantics
    # (bf16 inputs to both matmuls, f32 accumulation, f32 bias / LeakyReLU).
    def bf(a):
        return a.astype(jnp.bfloat16).astype(jnp.float32)

    x_cat = jnp.concatenate(inputs, axis=1)
    h_ref = jnp.dot(bf(x_cat), bf(w1), preferred_element_type=jnp.float32) + b1
    h_ref = jnp.where(h_ref > 0, h_ref, 0.01 * h_ref)
    y_ref = jnp.dot(bf(h_ref), bf(w2), preferred_element_type=jnp.float32) + b2

    assert jnp.allclose(out, y_ref, atol=1e-2, rtol=1e-2), (
        float(jnp.max(jnp.abs(out - y_ref))))

    print("KERNEL_OK")
</pallas_src>

<mosaic_0001>
module attributes {stable_mosaic.version = 11 : i64} {
  func.func @_mlp_kernel(%arg0: i32, %arg1: memref<16x32xbf16, #tpu.memory_space<vmem>>, %arg2: memref<32x128xbf16, #tpu.memory_space<vmem>>, %arg3: memref<1x128xf32, #tpu.memory_space<vmem>>, %arg4: memref<128x8xbf16, #tpu.memory_space<vmem>>, %arg5: memref<1x8xf32, #tpu.memory_space<vmem>>, %arg6: memref<16x8xf32, #tpu.memory_space<vmem>>) attributes {dimension_semantics = [#tpu.dimension_semantics<parallel>], iteration_bounds = array<i64: 1>, scalar_prefetch = 0 : i64, scratch_operands = 0 : i64, tpu.core_type = #tpu.core_type<tc>, window_params = [{transform_indices = @transform_0, window_bounds = array<i64: 16, 32>}, {pipeline_mode = #tpu.pipeline_mode<synchronous>, transform_indices = @transform_1, window_bounds = array<i64: 32, 128>}, {pipeline_mode = #tpu.pipeline_mode<synchronous>, transform_indices = @transform_2, window_bounds = array<i64: 1, 128>}, {pipeline_mode = #tpu.pipeline_mode<synchronous>, transform_indices = @transform_3, window_bounds = array<i64: 128, 8>}, {pipeline_mode = #tpu.pipeline_mode<synchronous>, transform_indices = @transform_4, window_bounds = array<i64: 1, 8>}, {transform_indices = @transform_5, window_bounds = array<i64: 16, 8>}]} {
    %c0 = arith.constant 0 : index
    %c0_0 = arith.constant 0 : index
    %0 = vector.load %arg1[%c0, %c0_0] : memref<16x32xbf16, #tpu.memory_space<vmem>>, vector<16x32xbf16>
    %c0_1 = arith.constant 0 : index
    %c0_2 = arith.constant 0 : index
    %1 = vector.load %arg2[%c0_1, %c0_2] : memref<32x128xbf16, #tpu.memory_space<vmem>>, vector<32x128xbf16>
    %cst = arith.constant dense<0.000000e+00> : vector<16x128xf32>
    %2 = tpu.matmul %0, %1, %cst {dimension_numbers = #tpu.dot_dimension_numbers<[1], [0], [0], [1], [0, 0, 1, 1], [], []>} : vector<16x32xbf16>, vector<32x128xbf16>, vector<16x128xf32> -> vector<16x128xf32>
    %c0_3 = arith.constant 0 : index
    %c0_4 = arith.constant 0 : index
    %3 = vector.load %arg3[%c0_3, %c0_4] : memref<1x128xf32, #tpu.memory_space<vmem>>, vector<1x128xf32>
    %4 = vector.broadcast %3 : vector<1x128xf32> to vector<16x128xf32>
    %5 = arith.addf %2, %4 : vector<16x128xf32>
    %cst_5 = arith.constant 0.000000e+00 : f32
    %6 = vector.broadcast %cst_5 : f32 to vector<16x128xf32>
    %7 = arith.cmpf ogt, %5, %6 : vector<16x128xf32>
    %cst_6 = arith.constant 0.00999999977 : f32
    %8 = vector.broadcast %cst_6 : f32 to vector<16x128xf32>
    %9 = arith.mulf %8, %5 : vector<16x128xf32>
    %10 = arith.select %7, %5, %9 : vector<16x128xi1>, vector<16x128xf32>
    %11 = arith.truncf %10 : vector<16x128xf32> to vector<16x128xbf16>
    %c0_7 = arith.constant 0 : index
    %c0_8 = arith.constant 0 : index
    %12 = vector.load %arg4[%c0_7, %c0_8] : memref<128x8xbf16, #tpu.memory_space<vmem>>, vector<128x8xbf16>
    %cst_9 = arith.constant dense<0.000000e+00> : vector<16x8xf32>
    %13 = tpu.matmul %11, %12, %cst_9 {dimension_numbers = #tpu.dot_dimension_numbers<[1], [0], [0], [1], [0, 0, 1, 1], [], []>} : vector<16x128xbf16>, vector<128x8xbf16>, vector<16x8xf32> -> vector<16x8xf32>
    %c0_10 = arith.constant 0 : index
    %c0_11 = arith.constant 0 : index
    %14 = vector.load %arg5[%c0_10, %c0_11] : memref<1x8xf32, #tpu.memory_space<vmem>>, vector<1x8xf32>
    %15 = vector.broadcast %14 : vector<1x8xf32> to vector<16x8xf32>
    %16 = arith.addf %13, %15 : vector<16x8xf32>
    %c0_12 = arith.constant 0 : index
    %c0_13 = arith.constant 0 : index
    %17 = vector.load %arg6[%c0_12, %c0_13] : memref<16x8xf32, #tpu.memory_space<vmem>>, vector<16x8xf32>
    tpu.vector_store %arg6[%c0_12, %c0_13], %16 {strides = array<i32>} : memref<16x8xf32, #tpu.memory_space<vmem>>, vector<16x8xf32>,
    return
  }
  func.func @transform_0(%arg0: i32) -> (i32, i32) {
    %c0_i32 = arith.constant 0 : i32
    %c0_i32_0 = arith.constant 0 : i32
    return %arg0, %c0_i32 : i32, i32
  }
  func.func @transform_1(%arg0: i32) -> (i32, i32) {
    %c0_i32 = arith.constant 0 : i32
    %c0_i32_0 = arith.constant 0 : i32
    %c0_i32_1 = arith.constant 0 : i32
    return %c0_i32, %c0_i32_0 : i32, i32
  }
  func.func @transform_2(%arg0: i32) -> (i32, i32) {
    %c0_i32 = arith.constant 0 : i32
    %c0_i32_0 = arith.constant 0 : i32
    %c0_i32_1 = arith.constant 0 : i32
    return %c0_i32, %c0_i32_0 : i32, i32
  }
  func.func @transform_3(%arg0: i32) -> (i32, i32) {
    %c0_i32 = arith.constant 0 : i32
    %c0_i32_0 = arith.constant 0 : i32
    %c0_i32_1 = arith.constant 0 : i32
    return %c0_i32, %c0_i32_0 : i32, i32
  }
  func.func @transform_4(%arg0: i32) -> (i32, i32) {
    %c0_i32 = arith.constant 0 : i32
    %c0_i32_0 = arith.constant 0 : i32
    %c0_i32_1 = arith.constant 0 : i32
    return %c0_i32, %c0_i32_0 : i32, i32
  }
  func.func @transform_5(%arg0: i32) -> (i32, i32) {
    %c0_i32 = arith.constant 0 : i32
    %c0_i32_0 = arith.constant 0 : i32
    return %arg0, %c0_i32 : i32, i32
  }
}

</mosaic_0001>

<llo_original>
// kernel: tpu_custom_call.1
$region0: #{tpu_custom_call.1}
  #allocation0 [shape = 'u32[]', space=smem, size = 0x4, offset = 0x4, fixed_abs, tag = 'smem constant byte address 0x4 - core index']
  #allocation1 [shape = 'u32[144,128]{1,0:T(1,128)}', space=vmem, size = 0x12000, scoped, tag = 'internal scratch']
  %s0 = inlined_call_operand.vmem [shape: bf16[16,32], index: 0, kind: input, shape index: {}]
  %s1 = inlined_call_operand.vmem [shape: bf16[32,128], index: 1, kind: input, shape index: {}]
  %s2 = inlined_call_operand.vmem [shape: f32[1,128], index: 2, kind: input, shape index: {}]
  %s3 = inlined_call_operand.vmem [shape: bf16[128,8], index: 3, kind: input, shape index: {}]
  %s4 = inlined_call_operand.vmem [shape: f32[1,8], index: 4, kind: input, shape index: {}]
  %s5 = inlined_call_operand.vmem [shape: f32[16,8], index: 5, kind: output, shape index: {}]
  %s6 = sld [smem:[#allocation0]]
  $region30: #{tpu_custom_call.1} parent=0
    _
  %s8 = ssub.s32 1, %s6
  %s9 = scalar_select 0, %s8, %s6
  // Predicated region
  $region2: #{tpu_custom_call.1} parent=0 // pred_check
    _
  $region3: #{tpu_custom_call.1} parent=0 // pred_check_branch
    %11 = sbr.rel (0) target = $region5
  $region4: #{tpu_custom_call.1} parent=0 // pred_region
    _
  $region5: #{tpu_custom_call.1} parent=0 // pred_fallthru
    _
  // Predicated region
  $region6: #{tpu_custom_call.1} parent=0 // pred_check
    _
  $region7: #{tpu_custom_call.1} parent=0 // pred_check_branch
    %13 = sbr.rel (0) target = $region9
  $region8: #{tpu_custom_call.1} parent=0 // pred_region
    _
  $region9: #{tpu_custom_call.1} parent=0 // pred_fallthru
    _
  // Predicated region
  $region10: #{tpu_custom_call.1} parent=0 // pred_check
    _
  $region11: #{tpu_custom_call.1} parent=0 // pred_check_branch
    %15 = sbr.rel (0) target = $region13
  $region12: #{tpu_custom_call.1} parent=0 // pred_region
    _
  $region13: #{tpu_custom_call.1} parent=0 // pred_fallthru
    _
  // Predicated region
  $region14: #{tpu_custom_call.1} parent=0 // pred_check
    _
  $region15: #{tpu_custom_call.1} parent=0 // pred_check_branch
    %17 = sbr.rel (0) target = $region17
  $region16: #{tpu_custom_call.1} parent=0 // pred_region
    _
  $region17: #{tpu_custom_call.1} parent=0 // pred_fallthru
    _
  // Predicated region
  $region18: #{tpu_custom_call.1} parent=0 // pred_check
    _
  $region19: #{tpu_custom_call.1} parent=0 // pred_check_branch
    %19 = sbr.rel (0) target = $region21
  $region20: #{tpu_custom_call.1} parent=0 // pred_region
    _
  $region21: #{tpu_custom_call.1} parent=0 // pred_fallthru
    _
  %v21 = vld [vmem:[%s0] sm:$0xf]
  %v22 = vld [vmem:[%s0 + $0x4] sm:$0xf]
  %v23 = vld [vmem:[%s1] sm:$0xf]
  %v24 = vld [vmem:[%s1 + $0x4] sm:$0xf]
  %v25 = vld [vmem:[%s1 + $0x8] sm:$0xf]
  %v26 = vld [vmem:[%s1 + $0xc] sm:$0xf]
  %v27 = vld [vmem:[%s2] sm:$0x1]
  %v29 = vlaneseq
  %v30 = vshrl.u32 %v29, 7
  %v31 = vsub.s32 0, %v30
  %v32 = vrot.slane %v27, %v31
  %v36 = vunpack.c.l.b16 %v21
  %v37 = vunpack.c.l.b16 %v22
  %v38 = vpack.c.b16 %v37, %v36
  %v43 = vunpack.c.l.b16 %v23
  %v44 = vunpack.c.l.b16 %v24
  %v45 = vunpack.c.l.b16 %v25
  %v46 = vunpack.c.l.b16 %v26
  %v47 = vpack.c.b16 %v44, %v43
  %v48 = vpack.c.b16 %v46, %v45
  %vm51 = vcmask 261120
  %v53 = vsel %vm51, %v38, 0
  %55 = vmatprep.subr.bf16.mxu0 0
  %56 = vmatpush1.bf16.msra.mxu0 %v47
  %57 = vmatprep.subr.bf16.mxu0 0
  %58 = vmatpush1.bf16.msra.mxu0 %v48
  %59 = vmatprep.subr.bf16.mxu0 0
  %60 = vmatpush1.bf16.msra.mxu0 0
  %61 = vmatprep.subr.bf16.mxu0 0
  %62 = vmatpush1.bf16.msra.mxu0 0
  %63 = vmatprep.subr.bf16.mxu0 0
  %64 = vmatpush1.bf16.msra.mxu0 0
  %65 = vmatprep.subr.bf16.mxu0 0
  %66 = vmatpush1.bf16.msra.mxu0 0
  %67 = vmatprep.subr.bf16.mxu0 0
  %68 = vmatpush1.bf16.msra.mxu0 0
  %69 = vmatprep.subr.bf16.mxu0 0
  %70 = vmatpush1.bf16.msra.mxu0 0
  %71 = vmatprep.subr.bf16.mxu0 0
  %72 = vmatpush1.bf16.msra.mxu0 0
  %73 = vmatprep.subr.bf16.mxu0 0
  %74 = vmatpush1.bf16.msra.mxu0 0
  %75 = vmatprep.subr.bf16.mxu0 0
  %76 = vmatpush1.bf16.msra.mxu0 0
  %77 = vmatprep.subr.bf16.mxu0 0
  %78 = vmatpush1.bf16.msra.mxu0 0
  %79 = vmatprep.subr.bf16.mxu0 0
  %80 = vmatpush1.bf16.msra.mxu0 0
  %81 = vmatprep.subr.bf16.mxu0 0
  %82 = vmatpush1.bf16.msra.mxu0 0
  %83 = vmatprep.subr.bf16.mxu0 0
  %84 = vmatpush1.bf16.msra.mxu0 0
  %85 = vmatprep.subr.bf16.mxu0 0
  %86 = vmatpush1.bf16.msra.mxu0 0
  %87 = vmatprep.mubr.bf16.mxu0 0
  %88 = vmatmul.mubr.bf16.gmra.mrb[0].mxu0 %v53
  %v89 = vpop.f32.mrb[0].mxu0
  %v90 = vadd.f32 %v32, %v89
  %v91 = vpop.f32.mrb[0].mxu0
  %v92 = vpop.f32.mrb[0].mxu0
  %v93 = vadd.f32 %v32, %v92
  %v94 = vpop.f32.mrb[0].mxu0
  %95 = vdwg.mxu0
  %vm96 = vcmp.gt.f32.partialorder %v90, 0.0
  %vm97 = vcmp.gt.f32.partialorder %v93, 0.0
  %v98 = vmul.f32 %v90, 0.01
  %v99 = vmul.f32 %v93, 0.01
  %v100 = vsel %vm96, %v90, %v98
  %v101 = vsel %vm97, %v93, %v99
  %v102 = vpack.c.bf16 %v101, %v100
  %v103 = vld [vmem:[%s3] sm:$0xf]
  %v104 = vld [vmem:[%s3 + $0x4] sm:$0xf]
  %v105 = vld [vmem:[%s3 + $0x8] sm:$0xf]
  %v106 = vld [vmem:[%s3 + $0xc] sm:$0xf]
  %v107 = vld [vmem:[%s3 + $0x10] sm:$0xf]
  %v108 = vld [vmem:[%s3 + $0x14] sm:$0xf]
  %v109 = vld [vmem:[%s3 + $0x18] sm:$0xf]
  %v110 = vld [vmem:[%s3 + $0x1c] sm:$0xf]
  %v111 = vld [vmem:[%s3 + $0x20] sm:$0xf]
  %v112 = vld [vmem:[%s3 + $0x24] sm:$0xf]
  %v113 = vld [vmem:[%s3 + $0x28] sm:$0xf]
  %v114 = vld [vmem:[%s3 + $0x2c] sm:$0xf]
  %v115 = vld [vmem:[%s3 + $0x30] sm:$0xf]
  %v116 = vld [vmem:[%s3 + $0x34] sm:$0xf]
  %v117 = vld [vmem:[%s3 + $0x38] sm:$0xf]
  %v118 = vld [vmem:[%s3 + $0x3c] sm:$0xf]
  %v119 = vld [vmem:[%s4] sm:$0x1]
  %v121 = vlaneseq
  %v122 = vshrl.u32 %v121, 7
  %v123 = vsub.s32 0, %v122
  %v124 = vrot.slane %v119, %v123
  %v142 = vunpack.c.l.b16 %v103
  %v143 = vunpack.c.l.b16 %v104
  %v144 = vunpack.c.l.b16 %v105
  %v145 = vunpack.c.l.b16 %v106
  %v146 = vunpack.c.l.b16 %v107
  %v147 = vunpack.c.l.b16 %v108
  %v148 = vunpack.c.l.b16 %v109
  %v149 = vunpack.c.l.b16 %v110
  %v150 = vunpack.c.l.b16 %v111
  %v151 = vunpack.c.l.b16 %v112
  %v152 = vunpack.c.l.b16 %v113
  %v153 = vunpack.c.l.b16 %v114
  %v154 = vunpack.c.l.b16 %v115
  %v155 = vunpack.c.l.b16 %v116
  %v156 = vunpack.c.l.b16 %v117
  %v157 = vunpack.c.l.b16 %v118
  %v158 = vpack.c.b16 %v143, %v142
  %v159 = vpack.c.b16 %v145, %v144
  %v160 = vpack.c.b16 %v147, %v146
  %v161 = vpack.c.b16 %v149, %v148
  %v162 = vpack.c.b16 %v151, %v150
  %v163 = vpack.c.b16 %v153, %v152
  %v164 = vpack.c.b16 %v155, %v154
  %v165 = vpack.c.b16 %v157, %v156
  %174 = vmatprep.subr.bf16.mxu0 0
  %175 = vmatpush1.bf16.msra.mxu0 %v158
  %176 = vmatprep.subr.bf16.mxu0 0
  %177 = vmatpush1.bf16.msra.mxu0 %v159
  %178 = vmatprep.subr.bf16.mxu0 0
  %179 = vmatpush1.bf16.msra.mxu0 %v160
  %180 = vmatprep.subr.bf16.mxu0 0
  %181 = vmatpush1.bf16.msra.mxu0 %v161
  %182 = vmatprep.subr.bf16.mxu0 0
  %183 = vmatpush1.bf16.msra.mxu0 %v162
  %184 = vmatprep.subr.bf16.mxu0 0
  %185 = vmatpush1.bf16.msra.mxu0 %v163
  %186 = vmatprep.subr.bf16.mxu0 0
  %187 = vmatpush1.bf16.msra.mxu0 %v164
  %188 = vmatprep.subr.bf16.mxu0 0
  %189 = vmatpush1.bf16.msra.mxu0 %v165
  %190 = vmatprep.subr.bf16.mxu0 0
  %191 = vmatpush1.bf16.msra.mxu0 0
  %192 = vmatprep.subr.bf16.mxu0 0
  %193 = vmatpush1.bf16.msra.mxu0 0
  %194 = vmatprep.subr.bf16.mxu0 0
  %195 = vmatpush1.bf16.msra.mxu0 0
  %196 = vmatprep.subr.bf16.mxu0 0
  %197 = vmatpush1.bf16.msra.mxu0 0
  %198 = vmatprep.subr.bf16.mxu0 0
  %199 = vmatpush1.bf16.msra.mxu0 0
  %200 = vmatprep.subr.bf16.mxu0 0
  %201 = vmatpush1.bf16.msra.mxu0 0
  %202 = vmatprep.subr.bf16.mxu0 0
  %203 = vmatpush1.bf16.msra.mxu0 0
  %204 = vmatprep.subr.bf16.mxu0 0
  %205 = vmatpush1.bf16.msra.mxu0 0
  %206 = vmatprep.mubr.bf16.mxu0 0
  %207 = vmatmul.mubr.bf16.gmra.mrb[0].mxu0 %v102
  %v208 = vpop.f32.mrb[0].mxu0
  %v209 = vadd.f32 %v124, %v208
  %v210 = vpop.f32.mrb[0].mxu0
  %v211 = vpop.f32.mrb[0].mxu0
  %v212 = vadd.f32 %v124, %v211
  %v213 = vpop.f32.mrb[0].mxu0
  %214 = vdwg.mxu0
  %vm215 = vcmask 64512
  %216 = vst.msk [vmem:[%s5] sm:$0xff] %vm215, %v209
  %217 = vst.msk [vmem:[%s5 + $0x8] sm:$0xff] %vm215, %v212
  // Predicated region
  $region22: #{tpu_custom_call.1} parent=0 // pred_check
    _
  $region23: #{tpu_custom_call.1} parent=0 // pred_check_branch
    %219 = sbr.rel (0) target = $region25
  $region24: #{tpu_custom_call.1} parent=0 // pred_region
    _
  $region25: #{tpu_custom_call.1} parent=0 // pred_fallthru
    _
  // Predicated region
  $region26: #{tpu_custom_call.1} parent=0 // pred_check
    _
  $region27: #{tpu_custom_call.1} parent=0 // pred_check_branch
    %221 = sbr.rel (0) target = $region29
  $region28: #{tpu_custom_call.1} parent=0 // pred_region
    _
  $region29: #{tpu_custom_call.1} parent=0 // pred_fallthru
    _

</llo_original>
